<compile_context>
chip_gen: v7x
topology: tpu7x:2x2x1
jax: 0.10.0
libtpu: 0.0.40
codegen_flags: <defaults>
</compile_context>

<pallas_src>
import math
from functools import partial

import jax
import jax.numpy as jnp
from jax.experimental import pallas as pl
from jax.experimental.pallas import tpu as pltpu

EPS = 1e-12  # torch.nn.functional.normalize default


def _mh_rmsnorm_kernel(x_ref, g_ref, *rest, use_seg_matmul, exact):
    if use_seg_matmul:
        m_ref, o_ref = rest
    else:
        (o_ref,) = rest

    # Per-head mode uses 3-D blocks with a leading length-1 (batch*head) axis.
    x = (x_ref[0] if len(x_ref.shape) == 3 else x_ref[...]).astype(jnp.float32)
    g = g_ref[0] if len(g_ref.shape) == 3 else g_ref[...]   # (1, W) or (R, W) f32

    x2 = x * x
    if use_seg_matmul:
        # Segmented sum of squares on the MXU: m is the (W, W) block-diagonal
        # ones matrix, so every lane receives the sum over its own D-segment.
        if exact:
            seg = jnp.dot(x2, m_ref[...],
                          precision=jax.lax.Precision.HIGHEST,
                          preferred_element_type=jnp.float32)
        else:
            # bf16 output path: single bf16 pass, error below bf16 quantization.
            seg = jnp.dot(x2.astype(jnp.bfloat16), m_ref[...],
                          preferred_element_type=jnp.float32)
    else:
        # Already lane-dense (D multiple of 128) or unfoldable fallback.
        seg = jnp.sum(x2, axis=-1, keepdims=True)

    # 1 / max(||x||, eps)  ==  rsqrt(max(sum_sq, eps^2))   (EUP slot)
    inv = jax.lax.rsqrt(jnp.maximum(seg, EPS * EPS))

    y = (x * inv * g).astype(o_ref.dtype)
    if len(o_ref.shape) == 3:
        o_ref[0] = y
    else:
        o_ref[...] = y


def multihead_rmsnorm(x, gamma, *, max_block_bytes=512 * 1024):
    """x: (B, H, S, D), gamma: (H, 1, D) -> (B, H, S, D)."""
    B, H, S, D = x.shape
    scale = float(D) ** 0.5
    exact = (x.dtype == jnp.float32)

    # ---- lane-dense packing: fold sequence rows so the packed width W is a
    # ---- multiple of 128 (full-width, unmasked stores).
    if D % 128 == 0:
        fold = 1
    else:
        fold = math.lcm(D, 128) // D
        if S % fold != 0 or fold * D > 512:
            # TODO(synk): pad S (or D) instead of falling back to sub-128 stores.
            fold = 1
    W = fold * D
    use_seg = fold > 1
    rows_per_head = S // fold            # packed rows per (batch, head)
    period = H * rows_per_head           # gamma pattern period in packed rows
    P = B * H * rows_per_head            # total packed rows

    # gamma * sqrt(D), tiled across the folded lanes; kept exact f32.
    g_row = gamma.reshape(H, D).astype(jnp.float32) * scale
    if fold > 1:
        g_row = jnp.tile(g_row, (1, fold))                 # (H, W)

    # Block-diagonal ones matrix for the segmented (per-D-chunk) reduction.
    if use_seg:
        seg_id = jnp.arange(W, dtype=jnp.int32) // D
        m_dtype = jnp.float32 if exact else jnp.bfloat16
        seg_ones = (seg_id[:, None] == seg_id[None, :]).astype(m_dtype)

    # ~0.5 MiB f32 per block (rounded to a multiple of 8 rows).
    cap = max(8, (max_block_bytes // (W * 4)) // 8 * 8)

    g8 = 8 // math.gcd(period, 8)
    R0 = period * g8                      # smallest mult-of-period, mult-of-8 block

    kernel = partial(_mh_rmsnorm_kernel, use_seg_matmul=use_seg, exact=exact)

    if R0 <= cap:
        # ---------- "slab" mode: R is a multiple of the gamma period ----------
        m_cap = min(cap // R0, P // R0)
        if P >= 2 * R0:                   # >= 2 grid steps so v7x's 2 TCs get work
            m_cap = min(m_cap, P // (2 * R0))
        if m_cap < 1:
            R = P                         # tiny input: single full-extent block
        else:                             # prefer R dividing P (no ragged block)
            m = next((mm for mm in range(m_cap, 0, -1) if P % (mm * R0) == 0),
                     m_cap)
            R = m * R0
        head_of_row = (jnp.arange(R) // rows_per_head) % H
        g_slab = g_row[head_of_row]       # (R, W) f32, VMEM-resident

        grid = (pl.cdiv(P, R),)
        inputs = [x.reshape(P, W), g_slab]
        in_specs = [pl.BlockSpec((R, W), lambda i: (i, 0)),
                    pl.BlockSpec((R, W), lambda i: (0, 0))]
        out_specs = pl.BlockSpec((R, W), lambda i: (i, 0))
        if use_seg:
            inputs.append(seg_ones)
            in_specs.append(pl.BlockSpec((W, W), lambda i: (0, 0)))
        dims = ("parallel",)
        out_shape = jax.ShapeDtypeStruct((P, W), x.dtype)
    else:
        # ---------- per-head mode: each block lies inside one (batch, head) ---
        # gamma is a single (1, W) row picked by the index_map and broadcast.
        Rh = rows_per_head
        if rows_per_head % 8 == 0:
            cands = [r for r in range(8, min(rows_per_head, cap) + 1, 8)
                     if rows_per_head % r == 0]
            if cands:
                if B * H == 1 and rows_per_head >= 16:   # keep grid >= 2 steps
                    cands = [r for r in cands if rows_per_head // r >= 2] or cands
                Rh = max(cands)
        # TODO(synk): if rows_per_head % 8 != 0 and rows_per_head*W*4 exceeds
        #             VMEM, pad rows_per_head up to a multiple of 8 instead.
        grid = (B * H, rows_per_head // Rh)
        inputs = [x.reshape(B * H, rows_per_head, W), g_row.reshape(H, 1, W)]
        in_specs = [pl.BlockSpec((1, Rh, W), lambda bh, j: (bh, j, 0)),
                    pl.BlockSpec((1, 1, W), lambda bh, j: (bh % H, 0, 0))]
        out_specs = pl.BlockSpec((1, Rh, W), lambda bh, j: (bh, j, 0))
        if use_seg:
            inputs.append(seg_ones)
            in_specs.append(pl.BlockSpec((W, W), lambda bh, j: (0, 0)))
        dims = ("parallel", "parallel")
        out_shape = jax.ShapeDtypeStruct((B * H, rows_per_head, W), x.dtype)

    out = pl.pallas_call(
        kernel,
        out_shape=out_shape,
        grid=grid,
        in_specs=in_specs,
        out_specs=out_specs,
        compiler_params=pltpu.CompilerParams(dimension_semantics=dims),
    )(*inputs)
    return out.reshape(B, H, S, D)


def multihead_rmsnorm_ref(x, gamma):
    scale = float(x.shape[-1]) ** 0.5
    xf = x.astype(jnp.float32)
    norm = jnp.sqrt(jnp.sum(xf * xf, axis=-1, keepdims=True))
    normed = xf / jnp.maximum(norm, EPS)
    return (normed * gamma.astype(jnp.float32)[None] * scale).astype(x.dtype)


if __name__ == "__main__":
    key = jax.random.PRNGKey(0)
    keys = jax.random.split(key, 10)
    fwd = jax.jit(multihead_rmsnorm, static_argnames=("max_block_bytes",))

    # 1) Primary shape (f32): D=32 -> 4 rows folded into 128 lanes, slab mode.
    B, H, S, D = 2, 4, 8, 32
    x = jax.random.normal(keys[0], (B, H, S, D), dtype=jnp.float32)
    gamma = 1.0 + 0.1 * jax.random.normal(keys[1], (H, 1, D), dtype=jnp.float32)
    out = jax.block_until_ready(fwd(x, gamma))
    ref = multihead_rmsnorm_ref(x, gamma)
    assert out.shape == x.shape and out.dtype == x.dtype
    assert jnp.allclose(out, ref, atol=2e-5, rtol=2e-5), "mismatch (slab/fold f32)"

    # 2) D=128 already lane-dense (plain reduce path), slab mode.
    x2 = jax.random.normal(keys[2], (1, 2, 16, 128), dtype=jnp.float32)
    gamma2 = 1.0 + 0.1 * jax.random.normal(keys[3], (2, 1, 128), dtype=jnp.float32)
    out2 = jax.block_until_ready(fwd(x2, gamma2))
    assert jnp.allclose(out2, multihead_rmsnorm_ref(x2, gamma2),
                        atol=2e-5, rtol=2e-5), "mismatch (slab/dense f32)"

    # 3) bf16 I/O production path (single bf16 MXU pass for the reduction).
    x3 = jax.random.normal(keys[4], (2, 4, 16, 64), dtype=jnp.bfloat16)
    gamma3 = 1.0 + 0.1 * jax.random.normal(keys[5], (4, 1, 64), dtype=jnp.float32)
    out3 = jax.block_until_ready(fwd(x3, gamma3))
    ref3 = multihead_rmsnorm_ref(x3, gamma3)
    assert out3.dtype == jnp.bfloat16
    assert jnp.allclose(out3.astype(jnp.float32), ref3.astype(jnp.float32),
                        atol=5e-2, rtol=5e-2), "mismatch (bf16)"

    # 4) Per-head mode (forced with a small block budget), aligned blocks.
    x4 = jax.random.normal(keys[6], (2, 2, 16, 128), dtype=jnp.float32)
    gamma4 = 1.0 + 0.1 * jax.random.normal(keys[7], (2, 1, 128), dtype=jnp.float32)
    out4 = jax.block_until_ready(fwd(x4, gamma4, max_block_bytes=4096))
    assert jnp.allclose(out4, multihead_rmsnorm_ref(x4, gamma4),
                        atol=2e-5, rtol=2e-5), "mismatch (per-head aligned)"

    # 5) Per-head mode with a non-multiple-of-8 full-extent row block.
    x5 = jax.random.normal(keys[8], (1, 2, 12, 128), dtype=jnp.float32)
    gamma5 = 1.0 + 0.1 * jax.random.normal(keys[9], (2, 1, 128), dtype=jnp.float32)
    out5 = jax.block_until_ready(fwd(x5, gamma5, max_block_bytes=4096))
    assert jnp.allclose(out5, multihead_rmsnorm_ref(x5, gamma5),
                        atol=2e-5, rtol=2e-5), "mismatch (per-head ragged)"

    print("KERNEL_OK")
</pallas_src>

<mosaic_0001>
module attributes {stable_mosaic.version = 11 : i64} {
  func.func @_mh_rmsnorm_kernel(%arg0: i32, %arg1: memref<8x128xf32, #tpu.memory_space<vmem>>, %arg2: memref<8x128xf32, #tpu.memory_space<vmem>>, %arg3: memref<128x128xf32, #tpu.memory_space<vmem>>, %arg4: memref<8x128xf32, #tpu.memory_space<vmem>>) attributes {dimension_semantics = [#tpu.dimension_semantics<parallel>], iteration_bounds = array<i64: 2>, scalar_prefetch = 0 : i64, scratch_operands = 0 : i64, tpu.core_type = #tpu.core_type<tc>, window_params = [{transform_indices = @transform_0, window_bounds = array<i64: 8, 128>}, {pipeline_mode = #tpu.pipeline_mode<synchronous>, transform_indices = @transform_1, window_bounds = array<i64: 8, 128>}, {pipeline_mode = #tpu.pipeline_mode<synchronous>, transform_indices = @transform_2, window_bounds = array<i64: 128, 128>}, {transform_indices = @transform_3, window_bounds = array<i64: 8, 128>}]} {
    %c0 = arith.constant 0 : index
    %c0_0 = arith.constant 0 : index
    %0 = vector.load %arg1[%c0, %c0_0] : memref<8x128xf32, #tpu.memory_space<vmem>>, vector<8x128xf32>
    %c0_1 = arith.constant 0 : index
    %c0_2 = arith.constant 0 : index
    %1 = vector.load %arg2[%c0_1, %c0_2] : memref<8x128xf32, #tpu.memory_space<vmem>>, vector<8x128xf32>
    %2 = arith.mulf %0, %0 : vector<8x128xf32>
    %c0_3 = arith.constant 0 : index
    %c0_4 = arith.constant 0 : index
    %3 = vector.load %arg3[%c0_3, %c0_4] : memref<128x128xf32, #tpu.memory_space<vmem>>, vector<128x128xf32>
    %cst = arith.constant dense<0.000000e+00> : vector<8x128xf32>
    %4 = tpu.matmul %2, %3, %cst {dimension_numbers = #tpu.dot_dimension_numbers<[1], [0], [0], [1], [0, 0, 1, 1], [], []>, precision = #tpu.contract_precision<fp32>} : vector<8x128xf32>, vector<128x128xf32>, vector<8x128xf32> -> vector<8x128xf32>
    %cst_5 = arith.constant 1.000000e-24 : f32
    %5 = vector.broadcast %cst_5 : f32 to vector<8x128xf32>
    %6 = arith.maximumf %4, %5 : vector<8x128xf32>
    %7 = math.rsqrt %6 : vector<8x128xf32>
    %8 = arith.mulf %0, %7 : vector<8x128xf32>
    %9 = arith.mulf %8, %1 : vector<8x128xf32>
    %c0_6 = arith.constant 0 : index
    %c0_7 = arith.constant 0 : index
    %10 = vector.load %arg4[%c0_6, %c0_7] : memref<8x128xf32, #tpu.memory_space<vmem>>, vector<8x128xf32>
    tpu.vector_store %arg4[%c0_6, %c0_7], %9 {strides = array<i32>} : memref<8x128xf32, #tpu.memory_space<vmem>>, vector<8x128xf32>,
    return
  }
  func.func @transform_0(%arg0: i32) -> (i32, i32) {
    %c0_i32 = arith.constant 0 : i32
    %c0_i32_0 = arith.constant 0 : i32
    return %arg0, %c0_i32 : i32, i32
  }
  func.func @transform_1(%arg0: i32) -> (i32, i32) {
    %c0_i32 = arith.constant 0 : i32
    %c0_i32_0 = arith.constant 0 : i32
    %c0_i32_1 = arith.constant 0 : i32
    return %c0_i32, %c0_i32_0 : i32, i32
  }
  func.func @transform_2(%arg0: i32) -> (i32, i32) {
    %c0_i32 = arith.constant 0 : i32
    %c0_i32_0 = arith.constant 0 : i32
    %c0_i32_1 = arith.constant 0 : i32
    return %c0_i32, %c0_i32_0 : i32, i32
  }
  func.func @transform_3(%arg0: i32) -> (i32, i32) {
    %c0_i32 = arith.constant 0 : i32
    %c0_i32_0 = arith.constant 0 : i32
    return %arg0, %c0_i32 : i32, i32
  }
}

</mosaic_0001>

<llo_original>
// kernel: tile.9
$region0: #{tile.9}
  %s0 = inlined_call_operand.vmem [shape: f32[4,4,32], index: 0, kind: input, shape index: {}]
  %s1 = inlined_call_operand.vmem [shape: f32[4,128], index: 1, kind: output, shape index: {}]
  $region1: #{tile.9} parent=0
    #allocation0 [shape = 'u8[4096]{0}', space=vmem, size = 0x1000, scoped, tag = 'scoped mem for output reshape']
    #allocation1 [shape = 'u8[16384]{0}', space=vmem, size = 0x4000, scoped, tag = 'scoped mem for input reshape']
    %s3 = sshllo.u32 0, 4
    %s4 = smul.addr 4, 3
    %s5 = scalar_lea.vmem %s0, %s4
    %v6 = vld [vmem:[%s5] sm:%s3]
    %s7 = scalar_lea.vmem [#allocation1], 24
    %8 = vst [vmem:[%s7] sm:%s3] %v6
    %s9 = smul.addr 4, 2
    %s10 = scalar_lea.vmem %s0, %s9
    %v11 = vld [vmem:[%s10] sm:%s3]
    %s12 = scalar_lea.vmem [#allocation1], 16
    %13 = vst [vmem:[%s12] sm:%s3] %v11
    %s14 = scalar_lea.vmem %s0, 4
    %v15 = vld [vmem:[%s14] sm:%s3]
    %s16 = scalar_lea.vmem [#allocation1], 8
    %17 = vst [vmem:[%s16] sm:%s3] %v15
    %v18 = vld [vmem:[%s0] sm:%s3]
    %19 = vst [vmem:[#allocation1] sm:%s3] %v18
    %v20 = vld [vmem:[#allocation1] ss:$8 sm:$0xf]
    %vm21 = vcmask 261120
    %22 = vst.msk [vmem:[#allocation0] sm:$0xf] %vm21, %v20
    %s23 = scalar_lea.vmem [#allocation1], 3
    %v24 = vld [vmem:[%s23] ss:$8 sm:$0xf]
    %25 = vrot.lane.b32.xlu0 %v24, 96
    %v26 = vpop.permute.xlu0 %25
    %vm27 = vcmask 1048320
    %28 = vst.msk [vmem:[#allocation0] sm:$0xf] %vm27, %v26
    %s29 = scalar_lea.vmem [#allocation1], 2
    %v30 = vld [vmem:[%s29] ss:$8 sm:$0xf]
    %31 = vrot.lane.b32.xlu0 %v30, 64
    %v32 = vpop.permute.xlu0 %31
    %vm33 = vcmask 785920
    %34 = vst.msk [vmem:[#allocation0] sm:$0xf] %vm33, %v32
    %s35 = scalar_lea.vmem [#allocation1], 1
    %v36 = vld [vmem:[%s35] ss:$8 sm:$0xf]
    %37 = vrot.lane.b32.xlu0 %v36, 32
    %v38 = vpop.permute.xlu0 %37
    %vm39 = vcmask 523520
    %40 = vst.msk [vmem:[#allocation0] sm:$0xf] %vm39, %v38
    %s42 = sshllo.u32 0, 4
    %v44 = vld [vmem:[#allocation0] sm:%s42]
    %s45 = sshllo.u32 0, 4
    %46 = vst [vmem:[%s1] sm:%s45] %v44

// kernel: multihead_rmsnorm.1
$region0: #{multihead_rmsnorm.1}
  #allocation0 [shape = 'u32[]', space=smem, size = 0x4, offset = 0x4, fixed_abs, tag = 'smem constant byte address 0x4 - core index']
  #allocation1 [shape = 'u32[144,128]{1,0:T(1,128)}', space=vmem, size = 0x12000, scoped, tag = 'internal scratch']
  %s0 = inlined_call_operand.vmem [shape: f32[16,128], index: 0, kind: input, shape index: {}]
  %s1 = inlined_call_operand.vmem [shape: f32[8,128], index: 1, kind: input, shape index: {}]
  %s2 = inlined_call_operand.vmem [shape: f32[128,128], index: 2, kind: input, shape index: {}]
  %s3 = inlined_call_operand.vmem [shape: f32[16,128], index: 3, kind: output, shape index: {}]
  %s4 = sld [smem:[#allocation0]]
  $region45: #{multihead_rmsnorm.1} parent=0
    _
  %s6 = ssub.s32 1, %s4
  %s7 = scalar_select 0, %s6, %s4
  loop: start=0, step=1, limit=4
  $region2: #{multihead_rmsnorm.1} parent=0 // loop_pre_header
    _
  $region3: #{multihead_rmsnorm.1} parent=0 // loop_header
    %s9 = sphi 0, %s13
    %p10 = scmp.ge.s32.totalorder %s9, 4
    %s19 = sphi 0, %s21
    %s22 = sphi 0, %s19
    %s23 = sphi 0, %s22
    %s39 = sphi 0, %s23
    %s43 = sphi 0, %s43
    %s45 = sphi 0, %s43
    %s46 = sphi 0, %s45
    %s60 = sphi 0, %s46
    %s64 = sphi 0, %s64
    %s66 = sphi 0, %s64
    %s67 = sphi 0, %s66
    %s81 = sphi 0, %s67
    %s87 = sphi 0, %s89
    %s90 = sphi 0, %s87
    %s91 = sphi 0, %s90
    %s107 = sphi 0, %s91
  $region4: #{multihead_rmsnorm.1} parent=0 // loop_header_branch
    %12 = sbr.rel (%p10) target = $region8
  $region5: #{multihead_rmsnorm.1} parent=0 // loop_body
    %s14 = ssub.s32 %s9, 1
    %s15 = ssub.s32 %s9, 2
    %s16 = sadd.s32 %s9, 1
    %s17 = ssub.s32 %s9, %s16
    %p18 = scmp.eq.s32.totalorder %s17, 0
    %s20 = sadd.s32 %s19, 1
    %s21 = scalar_select %p18, %s19, %s20
    %p24 = pneg %p18
    %p25 = scmp.eq.s32.totalorder %s9, 1
    %p26 = por %p24, %p25
    %p27 = scmp.ne.s32.totalorder %s19, %s22
    %p28 = scmp.eq.s32.totalorder %s9, 0
    %p29 = por %p27, %p28
    %p30 = scmp.ne.s32.totalorder %s19, %s22
    %p31 = scmp.eq.s32.totalorder %s14, 1
    %p32 = por %p30, %p31
    %p33 = scmp.ne.s32.totalorder %s22, %s23
    %p34 = scmp.eq.s32.totalorder %s14, 0
    %p35 = por %p33, %p34
    %p36 = scmp.ne.s32.totalorder %s22, %s23
    %p37 = scmp.eq.s32.totalorder %s15, 1
    %p38 = por %p36, %p37
    %p40 = scmp.ne.s32.totalorder %s23, %s39
    %p41 = scmp.eq.s32.totalorder %s15, 0
    %p42 = por %p40, %p41
    %s44 = sadd.s32 %s43, 1
    %p47 = scmp.eq.s32.totalorder %s9, 1
    %p48 = scmp.ne.s32.totalorder %s43, %s45
    %p49 = scmp.eq.s32.totalorder %s9, 0
    %p50 = por %p48, %p49
    %p51 = scmp.ne.s32.totalorder %s43, %s45
    %p52 = scmp.eq.s32.totalorder %s14, 1
    %p53 = por %p51, %p52
    %p54 = scmp.ne.s32.totalorder %s45, %s46
    %p55 = scmp.eq.s32.totalorder %s14, 0
    %p56 = por %p54, %p55
    %p57 = scmp.ne.s32.totalorder %s45, %s46
    %p58 = scmp.eq.s32.totalorder %s15, 1
    %p59 = por %p57, %p58
    %p61 = scmp.ne.s32.totalorder %s46, %s60
    %p62 = scmp.eq.s32.totalorder %s15, 0
    %p63 = por %p61, %p62
    %s65 = sadd.s32 %s64, 1
    %p68 = scmp.eq.s32.totalorder %s9, 1
    %p69 = scmp.ne.s32.totalorder %s64, %s66
    %p70 = scmp.eq.s32.totalorder %s9, 0
    %p71 = por %p69, %p70
    %p72 = scmp.ne.s32.totalorder %s64, %s66
    %p73 = scmp.eq.s32.totalorder %s14, 1
    %p74 = por %p72, %p73
    %p75 = scmp.ne.s32.totalorder %s66, %s67
    %p76 = scmp.eq.s32.totalorder %s14, 0
    %p77 = por %p75, %p76
    %p78 = scmp.ne.s32.totalorder %s66, %s67
    %p79 = scmp.eq.s32.totalorder %s15, 1
    %p80 = por %p78, %p79
    %p82 = scmp.ne.s32.totalorder %s67, %s81
    %p83 = scmp.eq.s32.totalorder %s15, 0
    %p84 = por %p82, %p83
    %s85 = ssub.s32 %s9, %s16
    %p86 = scmp.eq.s32.totalorder %s85, 0
    %s88 = sadd.s32 %s87, 1
    %s89 = scalar_select %p86, %s87, %s88
    %p92 = pneg %p86
    %p93 = scmp.eq.s32.totalorder %s9, 1
    %p94 = por %p92, %p93
    %p95 = scmp.ne.s32.totalorder %s87, %s90
    %p96 = scmp.eq.s32.totalorder %s9, 0
    %p97 = por %p95, %p96
    %p98 = scmp.ne.s32.totalorder %s87, %s90
    %p99 = scmp.eq.s32.totalorder %s14, 1
    %p100 = por %p98, %p99
    %p101 = scmp.ne.s32.totalorder %s90, %s91
    %p102 = scmp.eq.s32.totalorder %s14, 0
    %p103 = por %p101, %p102
    %p104 = scmp.ne.s32.totalorder %s90, %s91
    %p105 = scmp.eq.s32.totalorder %s15, 1
    %p106 = por %p104, %p105
    %p108 = scmp.ne.s32.totalorder %s91, %s107
    %p109 = scmp.eq.s32.totalorder %s15, 0
    %p110 = por %p108, %p109
    %p111 = scmp.le.s32.totalorder 1, %s9
    %p112 = scmp.lt.s32.totalorder %s9, 3
    %p113 = pnand %p111, %p112
    %p114 = pneg %p113
    // Predicated region
    $region9: #{multihead_rmsnorm.1} parent=5 // pred_check
      _
    $region10: #{multihead_rmsnorm.1} parent=5 // pred_check_branch
      %116 = sbr.rel (%p113) target = $region12
    $region11: #{multihead_rmsnorm.1} parent=5 // pred_region
      %s117 = ssub.s32 %s9, 1
      // Predicated region
      $region13: #{multihead_rmsnorm.1} parent=11 // pred_check
        %p118 = pneg %p56
      $region14: #{multihead_rmsnorm.1} parent=11 // pred_check_branch
        %120 = sbr.rel (%p118) target = $region16
      $region15: #{multihead_rmsnorm.1} parent=11 // pred_region
        _
      $region16: #{multihead_rmsnorm.1} parent=11 // pred_fallthru
        _
      // Predicated region
      $region17: #{multihead_rmsnorm.1} parent=11 // pred_check
        %p121 = pneg %p77
      $region18: #{multihead_rmsnorm.1} parent=11 // pred_check_branch
        %123 = sbr.rel (%p121) target = $region20
      $region19: #{multihead_rmsnorm.1} parent=11 // pred_region
        _
      $region20: #{multihead_rmsnorm.1} parent=11 // pred_fallthru
        _
    $region12: #{multihead_rmsnorm.1} parent=5 // pred_fallthru
      _
    %p124 = scmp.lt.s32.totalorder %s9, 2
    // Predicated region
    $region21: #{multihead_rmsnorm.1} parent=5 // pred_check
      %p125 = pneg %p124
    $region22: #{multihead_rmsnorm.1} parent=5 // pred_check_branch
      %127 = sbr.rel (%p125) target = $region24
    $region23: #{multihead_rmsnorm.1} parent=5 // pred_region
      // Predicated region
      $region25: #{multihead_rmsnorm.1} parent=23 // pred_check
        %p128 = pneg %p29
      $region26: #{multihead_rmsnorm.1} parent=23 // pred_check_branch
        %130 = sbr.rel (%p128) target = $region28
      $region27: #{multihead_rmsnorm.1} parent=23 // pred_region
        %p131 = scmp.lt.s32.totalorder %s9, 1
        %s132 = scalar_select %p131, %s9, 1
        %s133 = smul.addr %s132, 8
        %s134 = scalar_lea.vmem %s0, %s133
      $region28: #{multihead_rmsnorm.1} parent=23 // pred_fallthru
        _
    $region24: #{multihead_rmsnorm.1} parent=5 // pred_fallthru
      _
    %p135 = scmp.le.s32.totalorder 1, %s9
    %p136 = scmp.lt.s32.totalorder %s9, 3
    %p137 = pnand %p135, %p136
    %p138 = pneg %p137
    // Predicated region
    $region29: #{multihead_rmsnorm.1} parent=5 // pred_check
      _
    $region30: #{multihead_rmsnorm.1} parent=5 // pred_check_branch
      %140 = sbr.rel (%p137) target = $region32
    $region31: #{multihead_rmsnorm.1} parent=5 // pred_region
      %s141 = ssub.s32 %s9, 1
      %p142 = scmp.lt.s32.totalorder %s14, 1
      %s143 = scalar_select %p142, %s14, 1
      %s144 = smul.addr %s143, 8
      %s145 = scalar_lea.vmem %s0, %s144
      %p146 = pneg %p35
      %p147 = pneg %p32
      %p148 = pneg %p56
      %p149 = pneg %p53
      %p150 = pneg %p77
      %p151 = pneg %p74
      %p152 = pneg %p103
      %p153 = pneg %p100
      %p154 = scmp.lt.s32.totalorder %s14, 1
      %s155 = scalar_select %p154, %s14, 1
      %s156 = smul.addr %s155, 8
      %s157 = scalar_lea.vmem %s3, %s156
      %p158 = scmp.lt.s32.totalorder %s14, 1
      %s159 = scalar_select %p158, %s14, 1
      %s160 = smul.addr %s159, 8
      %s161 = scalar_lea.vmem %s0, %s160
      %p162 = scmp.lt.s32.totalorder %s14, 1
      %s163 = scalar_select %p162, %s14, 1
      %s164 = smul.addr %s163, 8
      %s165 = scalar_lea.vmem %s3, %s164
      %v166 = vld [vmem:[%s161] sm:$0xff]
      %v167 = vld [vmem:[%s1] sm:$0xff]
      %v168 = vmul.f32 %v166, %v166
      %v169 = vld [vmem:[%s2] sm:$0xff]
      %v170 = vld [vmem:[%s2 + $0x8] sm:$0xff]
      %v171 = vld [vmem:[%s2 + $0x10] sm:$0xff]
      %v172 = vld [vmem:[%s2 + $0x18] sm:$0xff]
      %v173 = vld [vmem:[%s2 + $0x20] sm:$0xff]
      %v174 = vld [vmem:[%s2 + $0x28] sm:$0xff]
      %v175 = vld [vmem:[%s2 + $0x30] sm:$0xff]
      %v176 = vld [vmem:[%s2 + $0x38] sm:$0xff]
      %v177 = vld [vmem:[%s2 + $0x40] sm:$0xff]
      %v178 = vld [vmem:[%s2 + $0x48] sm:$0xff]
      %v179 = vld [vmem:[%s2 + $0x50] sm:$0xff]
      %v180 = vld [vmem:[%s2 + $0x58] sm:$0xff]
      %v181 = vld [vmem:[%s2 + $0x60] sm:$0xff]
      %v182 = vld [vmem:[%s2 + $0x68] sm:$0xff]
      %v183 = vld [vmem:[%s2 + $0x70] sm:$0xff]
      %v184 = vld [vmem:[%s2 + $0x78] sm:$0xff]
      %185 = vmatprep.subr.mxu0 0.0
      %v186 = vand.u32 %v169, 4294901760
      %187 = vmatpush1.msra.mxu0 %v186
      %188 = vmatprep.subr.mxu0 0.0
      %v189 = vand.u32 %v170, 4294901760
      %190 = vmatpush1.msra.mxu0 %v189
      %191 = vmatprep.subr.mxu0 0.0
      %v192 = vand.u32 %v171, 4294901760
      %193 = vmatpush1.msra.mxu0 %v192
      %194 = vmatprep.subr.mxu0 0.0
      %v195 = vand.u32 %v172, 4294901760
      %196 = vmatpush1.msra.mxu0 %v195
      %197 = vmatprep.subr.mxu0 0.0
      %v198 = vand.u32 %v173, 4294901760
      %199 = vmatpush1.msra.mxu0 %v198
      %200 = vmatprep.subr.mxu0 0.0
      %v201 = vand.u32 %v174, 4294901760
      %202 = vmatpush1.msra.mxu0 %v201
      %203 = vmatprep.subr.mxu0 0.0
      %v204 = vand.u32 %v175, 4294901760
      %205 = vmatpush1.msra.mxu0 %v204
      %206 = vmatprep.subr.mxu0 0.0
      %v207 = vand.u32 %v176, 4294901760
      %208 = vmatpush1.msra.mxu0 %v207
      %209 = vmatprep.subr.mxu0 0.0
      %v210 = vand.u32 %v177, 4294901760
      %211 = vmatpush1.msra.mxu0 %v210
      %212 = vmatprep.subr.mxu0 0.0
      %v213 = vand.u32 %v178, 4294901760
      %214 = vmatpush1.msra.mxu0 %v213
      %215 = vmatprep.subr.mxu0 0.0
      %v216 = vand.u32 %v179, 4294901760
      %217 = vmatpush1.msra.mxu0 %v216
      %218 = vmatprep.subr.mxu0 0.0
      %v219 = vand.u32 %v180, 4294901760
      %220 = vmatpush1.msra.mxu0 %v219
      %221 = vmatprep.subr.mxu0 0.0
      %v222 = vand.u32 %v181, 4294901760
      %223 = vmatpush1.msra.mxu0 %v222
      %224 = vmatprep.subr.mxu0 0.0
      %v225 = vand.u32 %v182, 4294901760
      %226 = vmatpush1.msra.mxu0 %v225
      %227 = vmatprep.subr.mxu0 0.0
      %v228 = vand.u32 %v183, 4294901760
      %229 = vmatpush1.msra.mxu0 %v228
      %230 = vmatprep.subr.mxu0 0.0
      %v231 = vand.u32 %v184, 4294901760
      %232 = vmatpush1.msra.mxu0 %v231
      %233 = vmatprep.subr.mxu0 0.0
      %234 = vmatpush1.msra.mxu0 0.0
      %235 = vmatprep.subr.mxu0 0.0
      %236 = vmatpush1.msra.mxu0 0.0
      %237 = vmatprep.subr.mxu0 0.0
      %238 = vmatpush1.msra.mxu0 0.0
      %239 = vmatprep.subr.mxu0 0.0
      %240 = vmatpush1.msra.mxu0 0.0
      %241 = vmatprep.subr.mxu0 0.0
      %242 = vmatpush1.msra.mxu0 0.0
      %243 = vmatprep.subr.mxu0 0.0
      %244 = vmatpush1.msra.mxu0 0.0
      %245 = vmatprep.subr.mxu0 0.0
      %246 = vmatpush1.msra.mxu0 0.0
      %247 = vmatprep.subr.mxu0 0.0
      %248 = vmatpush1.msra.mxu0 0.0
      %249 = vmatprep.subr.mxu0 0.0
      %250 = vmatpush1.msra.mxu0 0.0
      %251 = vmatprep.subr.mxu0 0.0
      %252 = vmatpush1.msra.mxu0 0.0
      %253 = vmatprep.subr.mxu0 0.0
      %254 = vmatpush1.msra.mxu0 0.0
      %255 = vmatprep.subr.mxu0 0.0
      %256 = vmatpush1.msra.mxu0 0.0
      %257 = vmatprep.subr.mxu0 0.0
      %258 = vmatpush1.msra.mxu0 0.0
      %259 = vmatprep.subr.mxu0 0.0
      %260 = vmatpush1.msra.mxu0 0.0
      %261 = vmatprep.subr.mxu0 0.0
      %262 = vmatpush1.msra.mxu0 0.0
      %263 = vmatprep.subr.mxu0 0.0
      %264 = vmatpush1.msra.mxu0 0.0
      %265 = vmatprep.mubr.f32.mxu0 0.0
      %v266 = vand.u32 %v168, 4294901760
      %v267 = vsub.f32 %v168, %v266
      %v268 = vand.u32 %v267, 4294901760
      %v269 = vsub.f32 %v267, %v268
      %v270 = vand.u32 %v269, 4294901760
      %271 = vmatmul.mubr.f32.gmra.mrb[0].mxu0 %v270
      %v272 = vpop.f32.mrb[0].mxu0
      %v273 = vadd.f32 0.0, %v272
      %v274 = vpop.f32.mrb[0].mxu0
      %275 = vdwg.mxu0
      %276 = vmatprep.subr.mxu0 0.0
      %v277 = vand.u32 %v169, 4294901760
      %v278 = vsub.f32 %v169, %v277
      %v279 = vand.u32 %v278, 4294901760
      %v280 = vsub.f32 %v278, %v279
      %v281 = vand.u32 %v280, 4294901760
      %282 = vmatpush1.msra.mxu0 %v281
      %283 = vmatprep.subr.mxu0 0.0
      %v284 = vand.u32 %v170, 4294901760
      %v285 = vsub.f32 %v170, %v284
      %v286 = vand.u32 %v285, 4294901760
      %v287 = vsub.f32 %v285, %v286
      %v288 = vand.u32 %v287, 4294901760
      %289 = vmatpush1.msra.mxu0 %v288
      %290 = vmatprep.subr.mxu0 0.0
      %v291 = vand.u32 %v171, 4294901760
      %v292 = vsub.f32 %v171, %v291
      %v293 = vand.u32 %v292, 4294901760
      %v294 = vsub.f32 %v292, %v293
      %v295 = vand.u32 %v294, 4294901760
      %296 = vmatpush1.msra.mxu0 %v295
      %297 = vmatprep.subr.mxu0 0.0
      %v298 = vand.u32 %v172, 4294901760
      %v299 = vsub.f32 %v172, %v298
      %v300 = vand.u32 %v299, 4294901760
      %v301 = vsub.f32 %v299, %v300
      %v302 = vand.u32 %v301, 4294901760
      %303 = vmatpush1.msra.mxu0 %v302
      %304 = vmatprep.subr.mxu0 0.0
      %v305 = vand.u32 %v173, 4294901760
      %v306 = vsub.f32 %v173, %v305
      %v307 = vand.u32 %v306, 4294901760
      %v308 = vsub.f32 %v306, %v307
      %v309 = vand.u32 %v308, 4294901760
      %310 = vmatpush1.msra.mxu0 %v309
      %311 = vmatprep.subr.mxu0 0.0
      %v312 = vand.u32 %v174, 4294901760
      %v313 = vsub.f32 %v174, %v312
      %v314 = vand.u32 %v313, 4294901760
      %v315 = vsub.f32 %v313, %v314
      %v316 = vand.u32 %v315, 4294901760
      %317 = vmatpush1.msra.mxu0 %v316
      %318 = vmatprep.subr.mxu0 0.0
      %v319 = vand.u32 %v175, 4294901760
      %v320 = vsub.f32 %v175, %v319
      %v321 = vand.u32 %v320, 4294901760
      %v322 = vsub.f32 %v320, %v321
      %v323 = vand.u32 %v322, 4294901760
      %324 = vmatpush1.msra.mxu0 %v323
      %325 = vmatprep.subr.mxu0 0.0
      %v326 = vand.u32 %v176, 4294901760
      %v327 = vsub.f32 %v176, %v326
      %v328 = vand.u32 %v327, 4294901760
      %v329 = vsub.f32 %v327, %v328
      %v330 = vand.u32 %v329, 4294901760
      %331 = vmatpush1.msra.mxu0 %v330
      %332 = vmatprep.subr.mxu0 0.0
      %v333 = vand.u32 %v177, 4294901760
      %v334 = vsub.f32 %v177, %v333
      %v335 = vand.u32 %v334, 4294901760
      %v336 = vsub.f32 %v334, %v335
      %v337 = vand.u32 %v336, 4294901760
      %338 = vmatpush1.msra.mxu0 %v337
      %339 = vmatprep.subr.mxu0 0.0
      %v340 = vand.u32 %v178, 4294901760
      %v341 = vsub.f32 %v178, %v340
      %v342 = vand.u32 %v341, 4294901760
      %v343 = vsub.f32 %v341, %v342
      %v344 = vand.u32 %v343, 4294901760
      %345 = vmatpush1.msra.mxu0 %v344
      %346 = vmatprep.subr.mxu0 0.0
      %v347 = vand.u32 %v179, 4294901760
      %v348 = vsub.f32 %v179, %v347
      %v349 = vand.u32 %v348, 4294901760
      %v350 = vsub.f32 %v348, %v349
      %v351 = vand.u32 %v350, 4294901760
      %352 = vmatpush1.msra.mxu0 %v351
      %353 = vmatprep.subr.mxu0 0.0
      %v354 = vand.u32 %v180, 4294901760
      %v355 = vsub.f32 %v180, %v354
      %v356 = vand.u32 %v355, 4294901760
      %v357 = vsub.f32 %v355, %v356
      %v358 = vand.u32 %v357, 4294901760
      %359 = vmatpush1.msra.mxu0 %v358
      %360 = vmatprep.subr.mxu0 0.0
      %v361 = vand.u32 %v181, 4294901760
      %v362 = vsub.f32 %v181, %v361
      %v363 = vand.u32 %v362, 4294901760
      %v364 = vsub.f32 %v362, %v363
      %v365 = vand.u32 %v364, 4294901760
      %366 = vmatpush1.msra.mxu0 %v365
      %367 = vmatprep.subr.mxu0 0.0
      %v368 = vand.u32 %v182, 4294901760
      %v369 = vsub.f32 %v182, %v368
      %v370 = vand.u32 %v369, 4294901760
      %v371 = vsub.f32 %v369, %v370
      %v372 = vand.u32 %v371, 4294901760
      %373 = vmatpush1.msra.mxu0 %v372
      %374 = vmatprep.subr.mxu0 0.0
      %v375 = vand.u32 %v183, 4294901760
      %v376 = vsub.f32 %v183, %v375
      %v377 = vand.u32 %v376, 4294901760
      %v378 = vsub.f32 %v376, %v377
      %v379 = vand.u32 %v378, 4294901760
      %380 = vmatpush1.msra.mxu0 %v379
      %381 = vmatprep.subr.mxu0 0.0
      %v382 = vand.u32 %v184, 4294901760
      %v383 = vsub.f32 %v184, %v382
      %v384 = vand.u32 %v383, 4294901760
      %v385 = vsub.f32 %v383, %v384
      %v386 = vand.u32 %v385, 4294901760
      %387 = vmatpush1.msra.mxu0 %v386
      %388 = vmatprep.subr.mxu0 0.0
      %389 = vmatpush1.msra.mxu0 0.0
      %390 = vmatprep.subr.mxu0 0.0
      %391 = vmatpush1.msra.mxu0 0.0
      %392 = vmatprep.subr.mxu0 0.0
      %393 = vmatpush1.msra.mxu0 0.0
      %394 = vmatprep.subr.mxu0 0.0
      %395 = vmatpush1.msra.mxu0 0.0
      %396 = vmatprep.subr.mxu0 0.0
      %397 = vmatpush1.msra.mxu0 0.0
      %398 = vmatprep.subr.mxu0 0.0
      %399 = vmatpush1.msra.mxu0 0.0
      %400 = vmatprep.subr.mxu0 0.0
      %401 = vmatpush1.msra.mxu0 0.0
      %402 = vmatprep.subr.mxu0 0.0
      %403 = vmatpush1.msra.mxu0 0.0
      %404 = vmatprep.subr.mxu0 0.0
      %405 = vmatpush1.msra.mxu0 0.0
      %406 = vmatprep.subr.mxu0 0.0
      %407 = vmatpush1.msra.mxu0 0.0
      %408 = vmatprep.subr.mxu0 0.0
      %409 = vmatpush1.msra.mxu0 0.0
      %410 = vmatprep.subr.mxu0 0.0
      %411 = vmatpush1.msra.mxu0 0.0
      %412 = vmatprep.subr.mxu0 0.0
      %413 = vmatpush1.msra.mxu0 0.0
      %414 = vmatprep.subr.mxu0 0.0
      %415 = vmatpush1.msra.mxu0 0.0
      %416 = vmatprep.subr.mxu0 0.0
      %417 = vmatpush1.msra.mxu0 0.0
      %418 = vmatprep.subr.mxu0 0.0
      %419 = vmatpush1.msra.mxu0 0.0
      %420 = vmatprep.mubr.f32.mxu0 0.0
      %v421 = vand.u32 %v168, 4294901760
      %422 = vmatmul.mubr.f32.gmra.mrb[0].mxu0 %v421
      %v423 = vpop.f32.mrb[0].mxu0
      %v424 = vadd.f32 %v273, %v423
      %v425 = vpop.f32.mrb[0].mxu0
      %426 = vdwg.mxu0
      %427 = vmatprep.subr.mxu0 0.0
      %v428 = vand.u32 %v169, 4294901760
      %v429 = vsub.f32 %v169, %v428
      %430 = vmatpush1.msra.mxu0 %v429
      %431 = vmatprep.subr.mxu0 0.0
      %v432 = vand.u32 %v170, 4294901760
      %v433 = vsub.f32 %v170, %v432
      %434 = vmatpush1.msra.mxu0 %v433
      %435 = vmatprep.subr.mxu0 0.0
      %v436 = vand.u32 %v171, 4294901760
      %v437 = vsub.f32 %v171, %v436
      %438 = vmatpush1.msra.mxu0 %v437
      %439 = vmatprep.subr.mxu0 0.0
      %v440 = vand.u32 %v172, 4294901760
      %v441 = vsub.f32 %v172, %v440
      %442 = vmatpush1.msra.mxu0 %v441
      %443 = vmatprep.subr.mxu0 0.0
      %v444 = vand.u32 %v173, 4294901760
      %v445 = vsub.f32 %v173, %v444
      %446 = vmatpush1.msra.mxu0 %v445
      %447 = vmatprep.subr.mxu0 0.0
      %v448 = vand.u32 %v174, 4294901760
      %v449 = vsub.f32 %v174, %v448
      %450 = vmatpush1.msra.mxu0 %v449
      %451 = vmatprep.subr.mxu0 0.0
      %v452 = vand.u32 %v175, 4294901760
      %v453 = vsub.f32 %v175, %v452
      %454 = vmatpush1.msra.mxu0 %v453
      %455 = vmatprep.subr.mxu0 0.0
      %v456 = vand.u32 %v176, 4294901760
      %v457 = vsub.f32 %v176, %v456
      %458 = vmatpush1.msra.mxu0 %v457
      %459 = vmatprep.subr.mxu0 0.0
      %v460 = vand.u32 %v177, 4294901760
      %v461 = vsub.f32 %v177, %v460
      %462 = vmatpush1.msra.mxu0 %v461
      %463 = vmatprep.subr.mxu0 0.0
      %v464 = vand.u32 %v178, 4294901760
      %v465 = vsub.f32 %v178, %v464
      %466 = vmatpush1.msra.mxu0 %v465
      %467 = vmatprep.subr.mxu0 0.0
      %v468 = vand.u32 %v179, 4294901760
      %v469 = vsub.f32 %v179, %v468
      %470 = vmatpush1.msra.mxu0 %v469
      %471 = vmatprep.subr.mxu0 0.0
      %v472 = vand.u32 %v180, 4294901760
      %v473 = vsub.f32 %v180, %v472
      %474 = vmatpush1.msra.mxu0 %v473
      %475 = vmatprep.subr.mxu0 0.0
      %v476 = vand.u32 %v181, 4294901760
      %v477 = vsub.f32 %v181, %v476
      %478 = vmatpush1.msra.mxu0 %v477
      %479 = vmatprep.subr.mxu0 0.0
      %v480 = vand.u32 %v182, 4294901760
      %v481 = vsub.f32 %v182, %v480
      %482 = vmatpush1.msra.mxu0 %v481
      %483 = vmatprep.subr.mxu0 0.0
      %v484 = vand.u32 %v183, 4294901760
      %v485 = vsub.f32 %v183, %v484
      %486 = vmatpush1.msra.mxu0 %v485
      %487 = vmatprep.subr.mxu0 0.0
      %v488 = vand.u32 %v184, 4294901760
      %v489 = vsub.f32 %v184, %v488
      %490 = vmatpush1.msra.mxu0 %v489
      %491 = vmatprep.subr.mxu0 0.0
      %492 = vmatpush1.msra.mxu0 0.0
      %493 = vmatprep.subr.mxu0 0.0
      %494 = vmatpush1.msra.mxu0 0.0
      %495 = vmatprep.subr.mxu0 0.0
      %496 = vmatpush1.msra.mxu0 0.0
      %497 = vmatprep.subr.mxu0 0.0
      %498 = vmatpush1.msra.mxu0 0.0
      %499 = vmatprep.subr.mxu0 0.0
      %500 = vmatpush1.msra.mxu0 0.0
      %501 = vmatprep.subr.mxu0 0.0
      %502 = vmatpush1.msra.mxu0 0.0
      %503 = vmatprep.subr.mxu0 0.0
      %504 = vmatpush1.msra.mxu0 0.0
      %505 = vmatprep.subr.mxu0 0.0
      %506 = vmatpush1.msra.mxu0 0.0
      %507 = vmatprep.subr.mxu0 0.0
      %508 = vmatpush1.msra.mxu0 0.0
      %509 = vmatprep.subr.mxu0 0.0
      %510 = vmatpush1.msra.mxu0 0.0
      %511 = vmatprep.subr.mxu0 0.0
      %512 = vmatpush1.msra.mxu0 0.0
      %513 = vmatprep.subr.mxu0 0.0
      %514 = vmatpush1.msra.mxu0 0.0
      %515 = vmatprep.subr.mxu0 0.0
      %516 = vmatpush1.msra.mxu0 0.0
      %517 = vmatprep.subr.mxu0 0.0
      %518 = vmatpush1.msra.mxu0 0.0
      %519 = vmatprep.subr.mxu0 0.0
      %520 = vmatpush1.msra.mxu0 0.0
      %521 = vmatprep.subr.mxu0 0.0
      %522 = vmatpush1.msra.mxu0 0.0
      %523 = vmatprep.mubr.f32.mxu0 0.0
      %v524 = vand.u32 %v168, 4294901760
      %v525 = vsub.f32 %v168, %v524
      %526 = vmatmul.mubr.f32.gmra.mrb[0].mxu0 %v525
      %v527 = vpop.f32.mrb[0].mxu0
      %v528 = vadd.f32 %v424, %v527
      %v529 = vpop.f32.mrb[0].mxu0
      %530 = vdwg.mxu0
      %531 = vmatprep.subr.mxu0 0.0
      %v532 = vand.u32 %v169, 4294901760
      %533 = vmatpush1.msra.mxu0 %v532
      %534 = vmatprep.subr.mxu0 0.0
      %v535 = vand.u32 %v170, 4294901760
      %536 = vmatpush1.msra.mxu0 %v535
      %537 = vmatprep.subr.mxu0 0.0
      %v538 = vand.u32 %v171, 4294901760
      %539 = vmatpush1.msra.mxu0 %v538
      %540 = vmatprep.subr.mxu0 0.0
      %v541 = vand.u32 %v172, 4294901760
      %542 = vmatpush1.msra.mxu0 %v541
      %543 = vmatprep.subr.mxu0 0.0
      %v544 = vand.u32 %v173, 4294901760
      %545 = vmatpush1.msra.mxu0 %v544
      %546 = vmatprep.subr.mxu0 0.0
      %v547 = vand.u32 %v174, 4294901760
      %548 = vmatpush1.msra.mxu0 %v547
      %549 = vmatprep.subr.mxu0 0.0
      %v550 = vand.u32 %v175, 4294901760
      %551 = vmatpush1.msra.mxu0 %v550
      %552 = vmatprep.subr.mxu0 0.0
      %v553 = vand.u32 %v176, 4294901760
      %554 = vmatpush1.msra.mxu0 %v553
      %555 = vmatprep.subr.mxu0 0.0
      %v556 = vand.u32 %v177, 4294901760
      %557 = vmatpush1.msra.mxu0 %v556
      %558 = vmatprep.subr.mxu0 0.0
      %v559 = vand.u32 %v178, 4294901760
      %560 = vmatpush1.msra.mxu0 %v559
      %561 = vmatprep.subr.mxu0 0.0
      %v562 = vand.u32 %v179, 4294901760
      %563 = vmatpush1.msra.mxu0 %v562
      %564 = vmatprep.subr.mxu0 0.0
      %v565 = vand.u32 %v180, 4294901760
      %566 = vmatpush1.msra.mxu0 %v565
      %567 = vmatprep.subr.mxu0 0.0
      %v568 = vand.u32 %v181, 4294901760
      %569 = vmatpush1.msra.mxu0 %v568
      %570 = vmatprep.subr.mxu0 0.0
      %v571 = vand.u32 %v182, 4294901760
      %572 = vmatpush1.msra.mxu0 %v571
      %573 = vmatprep.subr.mxu0 0.0
      %v574 = vand.u32 %v183, 4294901760
      %575 = vmatpush1.msra.mxu0 %v574
      %576 = vmatprep.subr.mxu0 0.0
      %v577 = vand.u32 %v184, 4294901760
      %578 = vmatpush1.msra.mxu0 %v577
      %579 = vmatprep.subr.mxu0 0.0
      %580 = vmatpush1.msra.mxu0 0.0
      %581 = vmatprep.subr.mxu0 0.0
      %582 = vmatpush1.msra.mxu0 0.0
      %583 = vmatprep.subr.mxu0 0.0
      %584 = vmatpush1.msra.mxu0 0.0
      %585 = vmatprep.subr.mxu0 0.0
      %586 = vmatpush1.msra.mxu0 0.0
      %587 = vmatprep.subr.mxu0 0.0
      %588 = vmatpush1.msra.mxu0 0.0
      %589 = vmatprep.subr.mxu0 0.0
      %590 = vmatpush1.msra.mxu0 0.0
      %591 = vmatprep.subr.mxu0 0.0
      %592 = vmatpush1.msra.mxu0 0.0
      %593 = vmatprep.subr.mxu0 0.0
      %594 = vmatpush1.msra.mxu0 0.0
      %595 = vmatprep.subr.mxu0 0.0
      %596 = vmatpush1.msra.mxu0 0.0
      %597 = vmatprep.subr.mxu0 0.0
      %598 = vmatpush1.msra.mxu0 0.0
      %599 = vmatprep.subr.mxu0 0.0
      %600 = vmatpush1.msra.mxu0 0.0
      %601 = vmatprep.subr.mxu0 0.0
      %602 = vmatpush1.msra.mxu0 0.0
      %603 = vmatprep.subr.mxu0 0.0
      %604 = vmatpush1.msra.mxu0 0.0
      %605 = vmatprep.subr.mxu0 0.0
      %606 = vmatpush1.msra.mxu0 0.0
      %607 = vmatprep.subr.mxu0 0.0
      %608 = vmatpush1.msra.mxu0 0.0
      %609 = vmatprep.subr.mxu0 0.0
      %610 = vmatpush1.msra.mxu0 0.0
      %611 = vmatprep.mubr.f32.mxu0 0.0
      %v612 = vand.u32 %v168, 4294901760
      %v613 = vsub.f32 %v168, %v612
      %v614 = vand.u32 %v613, 4294901760
      %615 = vmatmul.mubr.f32.gmra.mrb[0].mxu0 %v614
      %v616 = vpop.f32.mrb[0].mxu0
      %v617 = vadd.f32 %v528, %v616
      %v618 = vpop.f32.mrb[0].mxu0
      %619 = vdwg.mxu0
      %620 = vmatprep.subr.mxu0 0.0
      %v621 = vand.u32 %v169, 4294901760
      %v622 = vsub.f32 %v169, %v621
      %v623 = vand.u32 %v622, 4294901760
      %624 = vmatpush1.msra.mxu0 %v623
      %625 = vmatprep.subr.mxu0 0.0
      %v626 = vand.u32 %v170, 4294901760
      %v627 = vsub.f32 %v170, %v626
      %v628 = vand.u32 %v627, 4294901760
      %629 = vmatpush1.msra.mxu0 %v628
      %630 = vmatprep.subr.mxu0 0.0
      %v631 = vand.u32 %v171, 4294901760
      %v632 = vsub.f32 %v171, %v631
      %v633 = vand.u32 %v632, 4294901760
      %634 = vmatpush1.msra.mxu0 %v633
      %635 = vmatprep.subr.mxu0 0.0
      %v636 = vand.u32 %v172, 4294901760
      %v637 = vsub.f32 %v172, %v636
      %v638 = vand.u32 %v637, 4294901760
      %639 = vmatpush1.msra.mxu0 %v638
      %640 = vmatprep.subr.mxu0 0.0
      %v641 = vand.u32 %v173, 4294901760
      %v642 = vsub.f32 %v173, %v641
      %v643 = vand.u32 %v642, 4294901760
      %644 = vmatpush1.msra.mxu0 %v643
      %645 = vmatprep.subr.mxu0 0.0
      %v646 = vand.u32 %v174, 4294901760
      %v647 = vsub.f32 %v174, %v646
      %v648 = vand.u32 %v647, 4294901760
      %649 = vmatpush1.msra.mxu0 %v648
      %650 = vmatprep.subr.mxu0 0.0
      %v651 = vand.u32 %v175, 4294901760
      %v652 = vsub.f32 %v175, %v651
      %v653 = vand.u32 %v652, 4294901760
      %654 = vmatpush1.msra.mxu0 %v653
      %655 = vmatprep.subr.mxu0 0.0
      %v656 = vand.u32 %v176, 4294901760
      %v657 = vsub.f32 %v176, %v656
      %v658 = vand.u32 %v657, 4294901760
      %659 = vmatpush1.msra.mxu0 %v658
      %660 = vmatprep.subr.mxu0 0.0
      %v661 = vand.u32 %v177, 4294901760
      %v662 = vsub.f32 %v177, %v661
      %v663 = vand.u32 %v662, 4294901760
      %664 = vmatpush1.msra.mxu0 %v663
      %665 = vmatprep.subr.mxu0 0.0
      %v666 = vand.u32 %v178, 4294901760
      %v667 = vsub.f32 %v178, %v666
      %v668 = vand.u32 %v667, 4294901760
      %669 = vmatpush1.msra.mxu0 %v668
      %670 = vmatprep.subr.mxu0 0.0
      %v671 = vand.u32 %v179, 4294901760
      %v672 = vsub.f32 %v179, %v671
      %v673 = vand.u32 %v672, 4294901760
      %674 = vmatpush1.msra.mxu0 %v673
      %675 = vmatprep.subr.mxu0 0.0
      %v676 = vand.u32 %v180, 4294901760
      %v677 = vsub.f32 %v180, %v676
      %v678 = vand.u32 %v677, 4294901760
      %679 = vmatpush1.msra.mxu0 %v678
      %680 = vmatprep.subr.mxu0 0.0
      %v681 = vand.u32 %v181, 4294901760
      %v682 = vsub.f32 %v181, %v681
      %v683 = vand.u32 %v682, 4294901760
      %684 = vmatpush1.msra.mxu0 %v683
      %685 = vmatprep.subr.mxu0 0.0
      %v686 = vand.u32 %v182, 4294901760
      %v687 = vsub.f32 %v182, %v686
      %v688 = vand.u32 %v687, 4294901760
      %689 = vmatpush1.msra.mxu0 %v688
      %690 = vmatprep.subr.mxu0 0.0
      %v691 = vand.u32 %v183, 4294901760
      %v692 = vsub.f32 %v183, %v691
      %v693 = vand.u32 %v692, 4294901760
      %694 = vmatpush1.msra.mxu0 %v693
      %695 = vmatprep.subr.mxu0 0.0
      %v696 = vand.u32 %v184, 4294901760
      %v697 = vsub.f32 %v184, %v696
      %v698 = vand.u32 %v697, 4294901760
      %699 = vmatpush1.msra.mxu0 %v698
      %700 = vmatprep.subr.mxu0 0.0
      %701 = vmatpush1.msra.mxu0 0.0
      %702 = vmatprep.subr.mxu0 0.0
      %703 = vmatpush1.msra.mxu0 0.0
      %704 = vmatprep.subr.mxu0 0.0
      %705 = vmatpush1.msra.mxu0 0.0
      %706 = vmatprep.subr.mxu0 0.0
      %707 = vmatpush1.msra.mxu0 0.0
      %708 = vmatprep.subr.mxu0 0.0
      %709 = vmatpush1.msra.mxu0 0.0
      %710 = vmatprep.subr.mxu0 0.0
      %711 = vmatpush1.msra.mxu0 0.0
      %712 = vmatprep.subr.mxu0 0.0
      %713 = vmatpush1.msra.mxu0 0.0
      %714 = vmatprep.subr.mxu0 0.0
      %715 = vmatpush1.msra.mxu0 0.0
      %716 = vmatprep.subr.mxu0 0.0
      %717 = vmatpush1.msra.mxu0 0.0
      %718 = vmatprep.subr.mxu0 0.0
      %719 = vmatpush1.msra.mxu0 0.0
      %720 = vmatprep.subr.mxu0 0.0
      %721 = vmatpush1.msra.mxu0 0.0
      %722 = vmatprep.subr.mxu0 0.0
      %723 = vmatpush1.msra.mxu0 0.0
      %724 = vmatprep.subr.mxu0 0.0
      %725 = vmatpush1.msra.mxu0 0.0
      %726 = vmatprep.subr.mxu0 0.0
      %727 = vmatpush1.msra.mxu0 0.0
      %728 = vmatprep.subr.mxu0 0.0
      %729 = vmatpush1.msra.mxu0 0.0
      %730 = vmatprep.subr.mxu0 0.0
      %731 = vmatpush1.msra.mxu0 0.0
      %732 = vmatprep.mubr.f32.mxu0 0.0
      %v733 = vand.u32 %v168, 4294901760
      %734 = vmatmul.mubr.f32.gmra.mrb[0].mxu0 %v733
      %v735 = vpop.f32.mrb[0].mxu0
      %v736 = vadd.f32 %v617, %v735
      %v737 = vpop.f32.mrb[0].mxu0
      %738 = vdwg.mxu0
      %739 = vmatprep.subr.mxu0 0.0
      %v740 = vand.u32 %v169, 4294901760
      %741 = vmatpush1.msra.mxu0 %v740
      %742 = vmatprep.subr.mxu0 0.0
      %v743 = vand.u32 %v170, 4294901760
      %744 = vmatpush1.msra.mxu0 %v743
      %745 = vmatprep.subr.mxu0 0.0
      %v746 = vand.u32 %v171, 4294901760
      %747 = vmatpush1.msra.mxu0 %v746
      %748 = vmatprep.subr.mxu0 0.0
      %v749 = vand.u32 %v172, 4294901760
      %750 = vmatpush1.msra.mxu0 %v749
      %751 = vmatprep.subr.mxu0 0.0
      %v752 = vand.u32 %v173, 4294901760
      %753 = vmatpush1.msra.mxu0 %v752
      %754 = vmatprep.subr.mxu0 0.0
      %v755 = vand.u32 %v174, 4294901760
      %756 = vmatpush1.msra.mxu0 %v755
      %757 = vmatprep.subr.mxu0 0.0
      %v758 = vand.u32 %v175, 4294901760
      %759 = vmatpush1.msra.mxu0 %v758
      %760 = vmatprep.subr.mxu0 0.0
      %v761 = vand.u32 %v176, 4294901760
      %762 = vmatpush1.msra.mxu0 %v761
      %763 = vmatprep.subr.mxu0 0.0
      %v764 = vand.u32 %v177, 4294901760
      %765 = vmatpush1.msra.mxu0 %v764
      %766 = vmatprep.subr.mxu0 0.0
      %v767 = vand.u32 %v178, 4294901760
      %768 = vmatpush1.msra.mxu0 %v767
      %769 = vmatprep.subr.mxu0 0.0
      %v770 = vand.u32 %v179, 4294901760
      %771 = vmatpush1.msra.mxu0 %v770
      %772 = vmatprep.subr.mxu0 0.0
      %v773 = vand.u32 %v180, 4294901760
      %774 = vmatpush1.msra.mxu0 %v773
      %775 = vmatprep.subr.mxu0 0.0
      %v776 = vand.u32 %v181, 4294901760
      %777 = vmatpush1.msra.mxu0 %v776
      %778 = vmatprep.subr.mxu0 0.0
      %v779 = vand.u32 %v182, 4294901760
      %780 = vmatpush1.msra.mxu0 %v779
      %781 = vmatprep.subr.mxu0 0.0
      %v782 = vand.u32 %v183, 4294901760
      %783 = vmatpush1.msra.mxu0 %v782
      %784 = vmatprep.subr.mxu0 0.0
      %v785 = vand.u32 %v184, 4294901760
      %786 = vmatpush1.msra.mxu0 %v785
      %787 = vmatprep.subr.mxu0 0.0
      %788 = vmatpush1.msra.mxu0 0.0
      %789 = vmatprep.subr.mxu0 0.0
      %790 = vmatpush1.msra.mxu0 0.0
      %791 = vmatprep.subr.mxu0 0.0
      %792 = vmatpush1.msra.mxu0 0.0
      %793 = vmatprep.subr.mxu0 0.0
      %794 = vmatpush1.msra.mxu0 0.0
      %795 = vmatprep.subr.mxu0 0.0
      %796 = vmatpush1.msra.mxu0 0.0
      %797 = vmatprep.subr.mxu0 0.0
      %798 = vmatpush1.msra.mxu0 0.0
      %799 = vmatprep.subr.mxu0 0.0
      %800 = vmatpush1.msra.mxu0 0.0
      %801 = vmatprep.subr.mxu0 0.0
      %802 = vmatpush1.msra.mxu0 0.0
      %803 = vmatprep.subr.mxu0 0.0
      %804 = vmatpush1.msra.mxu0 0.0
      %805 = vmatprep.subr.mxu0 0.0
      %806 = vmatpush1.msra.mxu0 0.0
      %807 = vmatprep.subr.mxu0 0.0
      %808 = vmatpush1.msra.mxu0 0.0
      %809 = vmatprep.subr.mxu0 0.0
      %810 = vmatpush1.msra.mxu0 0.0
      %811 = vmatprep.subr.mxu0 0.0
      %812 = vmatpush1.msra.mxu0 0.0
      %813 = vmatprep.subr.mxu0 0.0
      %814 = vmatpush1.msra.mxu0 0.0
      %815 = vmatprep.subr.mxu0 0.0
      %816 = vmatpush1.msra.mxu0 0.0
      %817 = vmatprep.subr.mxu0 0.0
      %818 = vmatpush1.msra.mxu0 0.0
      %819 = vmatprep.mubr.f32.mxu0 0.0
      %v820 = vand.u32 %v168, 4294901760
      %821 = vmatmul.mubr.f32.gmra.mrb[0].mxu0 %v820
      %v822 = vpop.f32.mrb[0].mxu0
      %v823 = vadd.f32 %v736, %v822
      %v824 = vpop.f32.mrb[0].mxu0
      %825 = vdwg.mxu0
      %v826 = vmax.f32 %v823, 1e-24
      %v827 = vrsqrt.pop %v826
      %v828 = vmul.f32 %v166, %v827
      %v829 = vmul.f32 %v828, %v167
      %830 = vst [vmem:[%s165] sm:$0xff] %v829
      %p831 = scmp.lt.s32.totalorder %s14, 1
      %s832 = scalar_select %p831, %s14, 1
      %s833 = smul.addr %s832, 8
      %s834 = scalar_lea.vmem %s3, %s833
      // Predicated region
      $region33: #{multihead_rmsnorm.1} parent=31 // pred_check
        %p835 = pneg %p100
      $region34: #{multihead_rmsnorm.1} parent=31 // pred_check_branch
        %837 = sbr.rel (%p835) target = $region36
      $region35: #{multihead_rmsnorm.1} parent=31 // pred_region
        _
      $region36: #{multihead_rmsnorm.1} parent=31 // pred_fallthru
        _
    $region32: #{multihead_rmsnorm.1} parent=5 // pred_fallthru
      _
    %p838 = scmp.le.s32.totalorder 2, %s9
    // Predicated region
    $region37: #{multihead_rmsnorm.1} parent=5 // pred_check
      %p839 = pneg %p838
    $region38: #{multihead_rmsnorm.1} parent=5 // pred_check_branch
      %841 = sbr.rel (%p839) target = $region40
    $region39: #{multihead_rmsnorm.1} parent=5 // pred_region
      %s842 = ssub.s32 %s9, 2
      // Predicated region
      $region41: #{multihead_rmsnorm.1} parent=39 // pred_check
        %p843 = pneg %p106
      $region42: #{multihead_rmsnorm.1} parent=39 // pred_check_branch
        %845 = sbr.rel (%p843) target = $region44
      $region43: #{multihead_rmsnorm.1} parent=39 // pred_region
        %p846 = scmp.lt.s32.totalorder %s15, 1
        %s847 = scalar_select %p846, %s15, 1
        %s848 = smul.addr %s847, 8
        %s849 = scalar_lea.vmem %s3, %s848
      $region44: #{multihead_rmsnorm.1} parent=39 // pred_fallthru
        _
    $region40: #{multihead_rmsnorm.1} parent=5 // pred_fallthru
      _
  $region6: #{multihead_rmsnorm.1} parent=0 // loop_footer
    %s13 = sadd.s32 1, %s9
  $region7: #{multihead_rmsnorm.1} parent=0 // loop_footer_branch
    %8 = sbr.rel target = $region3
  $region8: #{multihead_rmsnorm.1} parent=0 // loop_exit
    _

</llo_original>
